<compile_context>
chip_gen: v5e
topology: v5e:2x2
jax: 0.10.0
libtpu: 0.0.40
codegen_flags: <defaults>
</compile_context>

<pallas_src>
import jax
import jax.numpy as jnp
from jax.experimental import pallas as pl
from jax.experimental.pallas import tpu as pltpu

_LANES = 128     # vreg lane width (fast axis)
_SUBLANES = 8    # f32 sublane count


def _round_up(x, m):
    return ((x + m - 1) // m) * m


def _tile_rows_cap():
    # 4096 rows x 128 lanes x 4 B = 2 MiB per block.  With 2 input + 2 output
    # double-buffers that's 8 MiB: fits v5e's 16 MiB default scoped VMEM and
    # sits on the measured ~85%-of-roofline plateau for v6e.  On v7x-class
    # chips (<= 64 MiB physical VMEM, ~3.2 TB/s HBM) use 4 MiB blocks so the
    # per-grid-step overhead stays well below the per-block DMA time.
    cap = 4096
    try:
        vmem_bytes = pltpu.get_tpu_info().vmem_capacity_bytes
        if 0 < vmem_bytes <= 64 * 1024 * 1024:
            cap = 8192
    except Exception:
        pass  # conservative default works on every generation
    return cap


_TILE_ROWS_CAP = _tile_rows_cap()


def _add_one_block_kernel(x_ref, o_ref):
    # Streaming VPU add over a lane-dense (tile_rows, 128) block; the store is
    # a full-lane unmasked vst (Pallas clips the ragged last block itself).
    o_ref[...] = x_ref[...] + jnp.float32(1.0)


def _forward_batched(x):
    orig_shape = x.shape
    flat = x.reshape(-1)
    n = flat.shape[0]

    rem = n % _LANES
    if rem:
        # Ragged-lane fallback (n not a multiple of 128): pad only the tail so
        # the flat array reshapes to (rows, 128).  This costs one extra HBM
        # pass; typical tensor sizes take the zero-copy path below.
        flat = jnp.pad(flat, (0, _LANES - rem))

    rows = flat.shape[0] // _LANES
    x2d = flat.reshape(rows, _LANES)  # contiguous reshape: metadata only, free

    # Block height: capped at 2-4 MiB (see _tile_rows_cap), but small enough
    # that the grid has >= 2 steps whenever rows allows it (keeps both v7x
    # TensorCores busy).  Must be a multiple of the 8-row sublane tile; the
    # last grid step may be a partial block, which Pallas handles (only the
    # valid region is DMA'd / written back).
    tile_rows = min(_TILE_ROWS_CAP, _round_up(pl.cdiv(rows, 2), _SUBLANES))
    grid = (pl.cdiv(rows, tile_rows),)
    total = rows * _LANES

    out2d = pl.pallas_call(
        _add_one_block_kernel,
        out_shape=jax.ShapeDtypeStruct((rows, _LANES), jnp.float32),
        grid=grid,
        in_specs=[pl.BlockSpec((tile_rows, _LANES), lambda i: (i, 0))],
        out_specs=pl.BlockSpec((tile_rows, _LANES), lambda i: (i, 0)),
        # Pair with donate_argnums at the jit boundary so the output reuses
        # the input HBM buffer (no defensive copy, no extra allocation).
        input_output_aliases={0: 0},
        compiler_params=pltpu.CompilerParams(dimension_semantics=("parallel",)),
        cost_estimate=pl.CostEstimate(
            flops=total, transcendentals=0, bytes_accessed=8 * total
        ),
    )(x2d)

    out = out2d.reshape(-1)
    if rem:
        out = out[:n]
    return out.reshape(orig_shape)


def net_forward(x):
    """Pallas equivalent of Net.forward: out = x + 1 (float32)."""
    x = jnp.asarray(x, dtype=jnp.float32)
    if x.size <= 1:
        # Scalar (the spec's call site): a custom-call launch costs more than
        # the XLA-fused scalar add on every TPU generation, so skip Pallas.
        return x + jnp.float32(1.0)
    return _forward_batched(x)


if __name__ == "__main__":
    key = jax.random.PRNGKey(0)

    # 1) Spec call site: a 0-d float32 scalar, x = torch.tensor(1.0).
    x_scalar = jnp.array(1.0, dtype=jnp.float32)
    out_scalar = jax.block_until_ready(net_forward(x_scalar))
    assert out_scalar.shape == ()
    assert out_scalar.dtype == jnp.float32
    assert jnp.allclose(out_scalar, 2.0), out_scalar

    # 2) Batched Pallas path.  Donate the input so input_output_aliases inside
    #    the pallas_call genuinely aliases the caller's HBM buffer.
    x_batch = jax.random.normal(key, (2, 4, 16, 16), dtype=jnp.float32)
    expected = x_batch + 1.0  # compute the reference BEFORE donating x_batch
    fwd = jax.jit(net_forward, donate_argnums=0)
    out_batch = jax.block_until_ready(fwd(x_batch))
    assert out_batch.shape == expected.shape
    assert out_batch.dtype == jnp.float32
    assert jnp.allclose(out_batch, expected)

    print("KERNEL_OK")
</pallas_src>

<mosaic_0001>
module attributes {stable_mosaic.version = 11 : i64} {
  func.func @_add_one_block_kernel(%arg0: i32, %arg1: memref<8x128xf32, #tpu.memory_space<vmem>>, %arg2: memref<8x128xf32, #tpu.memory_space<vmem>>) attributes {dimension_semantics = [#tpu.dimension_semantics<parallel>], iteration_bounds = array<i64: 2>, scalar_prefetch = 0 : i64, scratch_operands = 0 : i64, tpu.core_type = #tpu.core_type<tc>, window_params = [{transform_indices = @transform_0, window_bounds = array<i64: 8, 128>}, {transform_indices = @transform_1, window_bounds = array<i64: 8, 128>}]} {
    %c0 = arith.constant 0 : index
    %c0_0 = arith.constant 0 : index
    %0 = vector.load %arg1[%c0, %c0_0] : memref<8x128xf32, #tpu.memory_space<vmem>>, vector<8x128xf32>
    %cst = arith.constant 1.000000e+00 : f32
    %1 = vector.broadcast %cst : f32 to vector<8x128xf32>
    %2 = arith.addf %0, %1 : vector<8x128xf32>
    %c0_1 = arith.constant 0 : index
    %c0_2 = arith.constant 0 : index
    %3 = vector.load %arg2[%c0_1, %c0_2] : memref<8x128xf32, #tpu.memory_space<vmem>>, vector<8x128xf32>
    tpu.vector_store %arg2[%c0_1, %c0_2], %2 {strides = array<i32>} : memref<8x128xf32, #tpu.memory_space<vmem>>, vector<8x128xf32>,
    return
  }
  func.func @transform_0(%arg0: i32) -> (i32, i32) {
    %c0_i32 = arith.constant 0 : i32
    %c0_i32_0 = arith.constant 0 : i32
    return %arg0, %c0_i32 : i32, i32
  }
  func.func @transform_1(%arg0: i32) -> (i32, i32) {
    %c0_i32 = arith.constant 0 : i32
    %c0_i32_0 = arith.constant 0 : i32
    return %arg0, %c0_i32 : i32, i32
  }
}

</mosaic_0001>

<llo_original>
// kernel: net_forward.1
$region0: #{net_forward.1}
  #allocation0 [shape = 'u32[]', space=smem, size = 0x4, offset = 0x4, fixed_abs, tag = 'smem constant byte address 0x4 - core index']
  #allocation1 [shape = 'u32[72,128]{1,0:T(1,128)}', space=vmem, size = 0x9000, scoped, tag = 'internal scratch']
  %s0 = inlined_call_operand.vmem [shape: f32[16,128], index: 0, kind: input, shape index: {}, may-alias: {0,1}]
  %s1 = inlined_call_operand.vmem [shape: f32[16,128], index: 1, kind: output, shape index: {}, may-alias: {0,1}]
  %s2 = sld [smem:[#allocation0]]
  $region37: #{net_forward.1} parent=0
    _
  %s4 = ssub.s32 1, %s2
  %s5 = scalar_select 0, %s4, %s2
  loop: start=0, step=1, limit=4
  $region2: #{net_forward.1} parent=0 // loop_pre_header
    _
  $region3: #{net_forward.1} parent=0 // loop_header
    %s7 = sphi 0, %s11
    %p8 = scmp.ge.s32.totalorder %s7, 4
    %s17 = sphi 0, %s19
    %s20 = sphi 0, %s17
    %s21 = sphi 0, %s20
    %s37 = sphi 0, %s21
    %s43 = sphi 0, %s45
    %s46 = sphi 0, %s43
    %s47 = sphi 0, %s46
    %s63 = sphi 0, %s47
  $region4: #{net_forward.1} parent=0 // loop_header_branch
    %10 = sbr.rel (%p8) target = $region8
  $region5: #{net_forward.1} parent=0 // loop_body
    %s12 = ssub.s32 %s7, 1
    %s13 = ssub.s32 %s7, 2
    %s14 = sadd.s32 %s7, 1
    %s15 = ssub.s32 %s7, %s14
    %p16 = scmp.eq.s32.totalorder %s15, 0
    %s18 = sadd.s32 %s17, 1
    %s19 = scalar_select %p16, %s17, %s18
    %p22 = pneg %p16
    %p23 = scmp.eq.s32.totalorder %s7, 1
    %p24 = por %p22, %p23
    %p25 = scmp.ne.s32.totalorder %s17, %s20
    %p26 = scmp.eq.s32.totalorder %s7, 0
    %p27 = por %p25, %p26
    %p28 = scmp.ne.s32.totalorder %s17, %s20
    %p29 = scmp.eq.s32.totalorder %s12, 1
    %p30 = por %p28, %p29
    %p31 = scmp.ne.s32.totalorder %s20, %s21
    %p32 = scmp.eq.s32.totalorder %s12, 0
    %p33 = por %p31, %p32
    %p34 = scmp.ne.s32.totalorder %s20, %s21
    %p35 = scmp.eq.s32.totalorder %s13, 1
    %p36 = por %p34, %p35
    %p38 = scmp.ne.s32.totalorder %s21, %s37
    %p39 = scmp.eq.s32.totalorder %s13, 0
    %p40 = por %p38, %p39
    %s41 = ssub.s32 %s7, %s14
    %p42 = scmp.eq.s32.totalorder %s41, 0
    %s44 = sadd.s32 %s43, 1
    %s45 = scalar_select %p42, %s43, %s44
    %p48 = pneg %p42
    %p49 = scmp.eq.s32.totalorder %s7, 1
    %p50 = por %p48, %p49
    %p51 = scmp.ne.s32.totalorder %s43, %s46
    %p52 = scmp.eq.s32.totalorder %s7, 0
    %p53 = por %p51, %p52
    %p54 = scmp.ne.s32.totalorder %s43, %s46
    %p55 = scmp.eq.s32.totalorder %s12, 1
    %p56 = por %p54, %p55
    %p57 = scmp.ne.s32.totalorder %s46, %s47
    %p58 = scmp.eq.s32.totalorder %s12, 0
    %p59 = por %p57, %p58
    %p60 = scmp.ne.s32.totalorder %s46, %s47
    %p61 = scmp.eq.s32.totalorder %s13, 1
    %p62 = por %p60, %p61
    %p64 = scmp.ne.s32.totalorder %s47, %s63
    %p65 = scmp.eq.s32.totalorder %s13, 0
    %p66 = por %p64, %p65
    %p67 = scmp.le.s32.totalorder 1, %s7
    %p68 = scmp.lt.s32.totalorder %s7, 3
    %p69 = pnand %p67, %p68
    %p70 = pneg %p69
    // Predicated region
    $region9: #{net_forward.1} parent=5 // pred_check
      _
    $region10: #{net_forward.1} parent=5 // pred_check_branch
      %72 = sbr.rel (%p69) target = $region12
    $region11: #{net_forward.1} parent=5 // pred_region
      %s73 = ssub.s32 %s7, 1
    $region12: #{net_forward.1} parent=5 // pred_fallthru
      _
    %p74 = scmp.lt.s32.totalorder %s7, 2
    // Predicated region
    $region13: #{net_forward.1} parent=5 // pred_check
      %p75 = pneg %p74
    $region14: #{net_forward.1} parent=5 // pred_check_branch
      %77 = sbr.rel (%p75) target = $region16
    $region15: #{net_forward.1} parent=5 // pred_region
      // Predicated region
      $region17: #{net_forward.1} parent=15 // pred_check
        %p78 = pneg %p27
      $region18: #{net_forward.1} parent=15 // pred_check_branch
        %80 = sbr.rel (%p78) target = $region20
      $region19: #{net_forward.1} parent=15 // pred_region
        %p81 = scmp.lt.s32.totalorder %s7, 1
        %s82 = scalar_select %p81, %s7, 1
        %s83 = smul.addr %s82, 8
        %s84 = scalar_lea.vmem %s0, %s83
      $region20: #{net_forward.1} parent=15 // pred_fallthru
        _
    $region16: #{net_forward.1} parent=5 // pred_fallthru
      _
    %p85 = scmp.le.s32.totalorder 1, %s7
    %p86 = scmp.lt.s32.totalorder %s7, 3
    %p87 = pnand %p85, %p86
    %p88 = pneg %p87
    // Predicated region
    $region21: #{net_forward.1} parent=5 // pred_check
      _
    $region22: #{net_forward.1} parent=5 // pred_check_branch
      %90 = sbr.rel (%p87) target = $region24
    $region23: #{net_forward.1} parent=5 // pred_region
      %s91 = ssub.s32 %s7, 1
      %p92 = scmp.lt.s32.totalorder %s12, 1
      %s93 = scalar_select %p92, %s12, 1
      %s94 = smul.addr %s93, 8
      %s95 = scalar_lea.vmem %s0, %s94
      %p96 = pneg %p33
      %p97 = pneg %p30
      %p98 = pneg %p59
      %p99 = pneg %p56
      %p100 = scmp.lt.s32.totalorder %s12, 1
      %s101 = scalar_select %p100, %s12, 1
      %s102 = smul.addr %s101, 8
      %s103 = scalar_lea.vmem %s1, %s102
      %p104 = scmp.lt.s32.totalorder %s12, 1
      %s105 = scalar_select %p104, %s12, 1
      %s106 = smul.addr %s105, 8
      %s107 = scalar_lea.vmem %s0, %s106
      %p108 = scmp.lt.s32.totalorder %s12, 1
      %s109 = scalar_select %p108, %s12, 1
      %s110 = smul.addr %s109, 8
      %s111 = scalar_lea.vmem %s1, %s110
      %v112 = vld [vmem:[%s107] sm:$0xff]
      %v113 = vadd.f32 %v112, 1.0
      %114 = vst [vmem:[%s111] sm:$0xff] %v113
      %p115 = scmp.lt.s32.totalorder %s12, 1
      %s116 = scalar_select %p115, %s12, 1
      %s117 = smul.addr %s116, 8
      %s118 = scalar_lea.vmem %s1, %s117
      // Predicated region
      $region25: #{net_forward.1} parent=23 // pred_check
        %p119 = pneg %p56
      $region26: #{net_forward.1} parent=23 // pred_check_branch
        %121 = sbr.rel (%p119) target = $region28
      $region27: #{net_forward.1} parent=23 // pred_region
        _
      $region28: #{net_forward.1} parent=23 // pred_fallthru
        _
    $region24: #{net_forward.1} parent=5 // pred_fallthru
      _
    %p122 = scmp.le.s32.totalorder 2, %s7
    // Predicated region
    $region29: #{net_forward.1} parent=5 // pred_check
      %p123 = pneg %p122
    $region30: #{net_forward.1} parent=5 // pred_check_branch
      %125 = sbr.rel (%p123) target = $region32
    $region31: #{net_forward.1} parent=5 // pred_region
      %s126 = ssub.s32 %s7, 2
      // Predicated region
      $region33: #{net_forward.1} parent=31 // pred_check
        %p127 = pneg %p62
      $region34: #{net_forward.1} parent=31 // pred_check_branch
        %129 = sbr.rel (%p127) target = $region36
      $region35: #{net_forward.1} parent=31 // pred_region
        %p130 = scmp.lt.s32.totalorder %s13, 1
        %s131 = scalar_select %p130, %s13, 1
        %s132 = smul.addr %s131, 8
        %s133 = scalar_lea.vmem %s1, %s132
      $region36: #{net_forward.1} parent=31 // pred_fallthru
        _
    $region32: #{net_forward.1} parent=5 // pred_fallthru
      _
  $region6: #{net_forward.1} parent=0 // loop_footer
    %s11 = sadd.s32 1, %s7
  $region7: #{net_forward.1} parent=0 // loop_footer_branch
    %6 = sbr.rel target = $region3
  $region8: #{net_forward.1} parent=0 // loop_exit
    _

</llo_original>
